<compile_context>
chip_gen: v5e
topology: v5e:2x2
jax: 0.10.0
libtpu: 0.0.40
codegen_flags: <defaults>
</compile_context>

<pallas_src>
import jax
import jax.numpy as jnp
from jax.experimental import pallas as pl
from jax.experimental.pallas import tpu as pltpu


def policy_mlp_kernel(x_ref, w1_ref, b1_ref, w2_ref, b2_ref, o_ref):
    # x arrives in f32 from HBM; cast to bf16 on the VPU (plenty of slack).
    x = x_ref[...].astype(jnp.bfloat16)
    # Layer 1: bf16 x @ bf16 W1 -> f32 accumulate on the MXU.
    h = jnp.dot(x, w1_ref[...], preferred_element_type=jnp.float32)
    h = jnp.maximum(h + b1_ref[...], 0.0)          # bias + ReLU in f32 (VPU)
    # Layer 2: cast h back to bf16 for the MXU, accumulate in f32.
    o = jnp.dot(h.astype(w2_ref.dtype), w2_ref[...],
                preferred_element_type=jnp.float32)
    o_ref[...] = (o + b2_ref[...]).astype(o_ref.dtype)


def _round_up(n, m):
    return ((n + m - 1) // m) * m


def _choose_tile(B, tb_max):
    """Batch-tile policy.

    - B <= 256: one tile (latency path), rounded to the 8-sublane f32 packing.
    - B  > 256: >= 256-row tiles (amortize ~0.35 us/step grid overhead), and
      ~ceil(B/4) per tile so there are >= 2 (usually >= 4) tiles for v7x
      megacore sharding, capped at tb_max.  Always <= B, so no partial tile
      ever exceeds the array.
    """
    if B <= 256:
        return _round_up(B, 8)
    tb = _round_up(-(-B // 4), 16)          # ceil(B/4), 16-row aligned
    return max(256, min(tb, tb_max))


def policy_network_forward(x, w1, b1, w2, b2, *, tb_max=2048):
    """x: (B, obs_dim) f32; w1: (obs_dim, hidden); w2: (hidden, act_dim).
    Returns (B, act_dim) f32."""
    B, obs_dim = x.shape
    hidden = w1.shape[1]
    act_dim = w2.shape[1]

    # ---- weights in bf16 (MXU inputs); biases stay f32 (VPU add). ----
    w1_lo = w1.astype(jnp.bfloat16)
    w2_lo = w2.astype(jnp.bfloat16)
    b1_f = jnp.asarray(b1, jnp.float32).reshape(1, hidden)
    b2_f = jnp.asarray(b2, jnp.float32).reshape(1, act_dim)

    # ---- lane-dense hidden: pad to a multiple of 128 (exact no-op:
    # relu(0 + 0) = 0 and the corresponding W2 rows are zero). ----
    hidden_p = _round_up(hidden, 128)
    if hidden_p != hidden:
        ph = hidden_p - hidden
        w1_lo = jnp.pad(w1_lo, ((0, 0), (0, ph)))
        b1_f = jnp.pad(b1_f, ((0, 0), (0, ph)))
        w2_lo = jnp.pad(w2_lo, ((0, ph), (0, 0)))

    # ---- small-batch latency path only: pad act_dim to 128 so the output
    # store is a dense full-lane vst.  For larger B the natural act_dim is
    # kept to avoid inflating f32 writeback (and W2 work) 16x. ----
    pad_out = (act_dim % 128 != 0) and (B <= 128)
    act_p = _round_up(act_dim, 128) if pad_out else act_dim
    if act_p != act_dim:
        pa = act_p - act_dim
        w2_lo = jnp.pad(w2_lo, ((0, 0), (0, pa)))
        b2_f = jnp.pad(b2_f, ((0, 0), (0, pa)))

    # ---- batch tiling: x streamed in f32 (no wrapper cast / no large-B pad);
    # partial last tile handled by Pallas boundary masking. ----
    tb = _choose_tile(B, tb_max)
    x_in = x.astype(jnp.float32)
    rows = B
    if tb > B:                       # single small tile: pad the few missing rows
        x_in = jnp.pad(x_in, ((0, tb - B), (0, 0)))
        rows = tb
    grid = (pl.cdiv(rows, tb),)

    out = pl.pallas_call(
        policy_mlp_kernel,
        out_shape=jax.ShapeDtypeStruct((rows, act_p), jnp.float32),
        grid_spec=pltpu.PrefetchScalarGridSpec(
            num_scalar_prefetch=0,
            grid=grid,
            in_specs=[
                # x: streamed per batch tile (double-buffered by Pallas).
                pl.BlockSpec((tb, obs_dim), lambda i: (i, 0)),
                # Weights / biases: full-array blocks, VMEM-resident.
                pl.BlockSpec((obs_dim, hidden_p), lambda i: (0, 0)),
                pl.BlockSpec((1, hidden_p), lambda i: (0, 0)),
                pl.BlockSpec((hidden_p, act_p), lambda i: (0, 0)),
                pl.BlockSpec((1, act_p), lambda i: (0, 0)),
            ],
            out_specs=pl.BlockSpec((tb, act_p), lambda i: (i, 0)),
        ),
        compiler_params=pltpu.CompilerParams(
            dimension_semantics=("parallel",)),
    )(x_in, w1_lo, b1_f, w2_lo, b2_f)

    return out[:B, :act_dim]


def init_params(key, obs_dim, hidden, act_dim):
    """Deterministic init mimicking nn.Linear's U(-1/sqrt(fan_in), 1/sqrt(fan_in))."""
    k1, k2, k3, k4 = jax.random.split(key, 4)
    lim1 = 1.0 / jnp.sqrt(obs_dim)
    lim2 = 1.0 / jnp.sqrt(hidden)
    w1 = jax.random.uniform(k1, (obs_dim, hidden), jnp.float32, -lim1, lim1)
    b1 = jax.random.uniform(k2, (hidden,), jnp.float32, -lim1, lim1)
    w2 = jax.random.uniform(k3, (hidden, act_dim), jnp.float32, -lim2, lim2)
    b2 = jax.random.uniform(k4, (act_dim,), jnp.float32, -lim2, lim2)
    return w1, b1, w2, b2


def _reference_bf16(x, w1, b1, w2, b2):
    """Pure-JAX reference with the same bf16-input / f32-accumulate recipe."""
    h = jnp.dot(x.astype(jnp.bfloat16), w1.astype(jnp.bfloat16),
                preferred_element_type=jnp.float32) + b1
    h = jnp.maximum(h, 0.0)
    return jnp.dot(h.astype(jnp.bfloat16), w2.astype(jnp.bfloat16),
                   preferred_element_type=jnp.float32) + b2


if __name__ == "__main__":
    obs_dim, hidden, act_dim, batch = 32, 64, 8, 8

    key = jax.random.PRNGKey(0)
    kx, kp = jax.random.split(key)
    x = jax.random.normal(kx, (batch, obs_dim), jnp.float32)
    w1, b1, w2, b2 = init_params(kp, obs_dim, hidden, act_dim)

    out = policy_network_forward(x, w1, b1, w2, b2)
    jax.block_until_ready(out)
    assert out.shape == (batch, act_dim)

    # Check against a bf16-emulated pure-JAX reference (tight) and the full
    # f32 reference (loose, covers the intentional bf16 quantization error).
    ref_lo = _reference_bf16(x, w1, b1, w2, b2)
    ref_f32 = jnp.maximum(x @ w1 + b1, 0.0) @ w2 + b2
    assert jnp.allclose(out, ref_lo, atol=1e-3, rtol=1e-3)
    assert jnp.allclose(out, ref_f32, atol=5e-2, rtol=5e-2)

    # Exercise the multi-tile large-B path: B not a multiple of the tile,
    # partial last block handled by Pallas boundary masking (no batch pad).
    x2 = jax.random.normal(jax.random.PRNGKey(1), (300, obs_dim), jnp.float32)
    out2 = policy_network_forward(x2, w1, b1, w2, b2)
    jax.block_until_ready(out2)
    assert out2.shape == (300, act_dim)
    assert jnp.allclose(out2, _reference_bf16(x2, w1, b1, w2, b2),
                        atol=1e-3, rtol=1e-3)

    print("KERNEL_OK")
</pallas_src>

<mosaic_0001>
module attributes {stable_mosaic.version = 11 : i64} {
  func.func @policy_mlp_kernel(%arg0: i32, %arg1: memref<8x32xf32, #tpu.memory_space<vmem>>, %arg2: memref<32x128xbf16, #tpu.memory_space<vmem>>, %arg3: memref<1x128xf32, #tpu.memory_space<vmem>>, %arg4: memref<128x128xbf16, #tpu.memory_space<vmem>>, %arg5: memref<1x128xf32, #tpu.memory_space<vmem>>, %arg6: memref<8x128xf32, #tpu.memory_space<vmem>>) attributes {dimension_semantics = [#tpu.dimension_semantics<parallel>], iteration_bounds = array<i64: 1>, scalar_prefetch = 0 : i64, scratch_operands = 0 : i64, tpu.core_type = #tpu.core_type<tc>, window_params = [{transform_indices = @transform_0, window_bounds = array<i64: 8, 32>}, {pipeline_mode = #tpu.pipeline_mode<synchronous>, transform_indices = @transform_1, window_bounds = array<i64: 32, 128>}, {pipeline_mode = #tpu.pipeline_mode<synchronous>, transform_indices = @transform_2, window_bounds = array<i64: 1, 128>}, {pipeline_mode = #tpu.pipeline_mode<synchronous>, transform_indices = @transform_3, window_bounds = array<i64: 128, 128>}, {pipeline_mode = #tpu.pipeline_mode<synchronous>, transform_indices = @transform_4, window_bounds = array<i64: 1, 128>}, {transform_indices = @transform_5, window_bounds = array<i64: 8, 128>}]} {
    %c0 = arith.constant 0 : index
    %c0_0 = arith.constant 0 : index
    %0 = vector.load %arg1[%c0, %c0_0] : memref<8x32xf32, #tpu.memory_space<vmem>>, vector<8x32xf32>
    %1 = arith.truncf %0 : vector<8x32xf32> to vector<8x32xbf16>
    %c0_1 = arith.constant 0 : index
    %c0_2 = arith.constant 0 : index
    %2 = vector.load %arg2[%c0_1, %c0_2] : memref<32x128xbf16, #tpu.memory_space<vmem>>, vector<32x128xbf16>
    %cst = arith.constant dense<0.000000e+00> : vector<8x128xf32>
    %3 = tpu.matmul %1, %2, %cst {dimension_numbers = #tpu.dot_dimension_numbers<[1], [0], [0], [1], [0, 0, 1, 1], [], []>} : vector<8x32xbf16>, vector<32x128xbf16>, vector<8x128xf32> -> vector<8x128xf32>
    %c0_3 = arith.constant 0 : index
    %c0_4 = arith.constant 0 : index
    %4 = vector.load %arg3[%c0_3, %c0_4] : memref<1x128xf32, #tpu.memory_space<vmem>>, vector<1x128xf32>
    %5 = vector.broadcast %4 : vector<1x128xf32> to vector<8x128xf32>
    %6 = arith.addf %3, %5 : vector<8x128xf32>
    %cst_5 = arith.constant 0.000000e+00 : f32
    %7 = vector.broadcast %cst_5 : f32 to vector<8x128xf32>
    %8 = arith.maximumf %6, %7 : vector<8x128xf32>
    %9 = arith.truncf %8 : vector<8x128xf32> to vector<8x128xbf16>
    %c0_6 = arith.constant 0 : index
    %c0_7 = arith.constant 0 : index
    %10 = vector.load %arg4[%c0_6, %c0_7] : memref<128x128xbf16, #tpu.memory_space<vmem>>, vector<128x128xbf16>
    %cst_8 = arith.constant dense<0.000000e+00> : vector<8x128xf32>
    %11 = tpu.matmul %9, %10, %cst_8 {dimension_numbers = #tpu.dot_dimension_numbers<[1], [0], [0], [1], [0, 0, 1, 1], [], []>} : vector<8x128xbf16>, vector<128x128xbf16>, vector<8x128xf32> -> vector<8x128xf32>
    %c0_9 = arith.constant 0 : index
    %c0_10 = arith.constant 0 : index
    %12 = vector.load %arg5[%c0_9, %c0_10] : memref<1x128xf32, #tpu.memory_space<vmem>>, vector<1x128xf32>
    %13 = vector.broadcast %12 : vector<1x128xf32> to vector<8x128xf32>
    %14 = arith.addf %11, %13 : vector<8x128xf32>
    %c0_11 = arith.constant 0 : index
    %c0_12 = arith.constant 0 : index
    %15 = vector.load %arg6[%c0_11, %c0_12] : memref<8x128xf32, #tpu.memory_space<vmem>>, vector<8x128xf32>
    tpu.vector_store %arg6[%c0_11, %c0_12], %14 {strides = array<i32>} : memref<8x128xf32, #tpu.memory_space<vmem>>, vector<8x128xf32>,
    return
  }
  func.func @transform_0(%arg0: i32) -> (i32, i32) {
    %c0_i32 = arith.constant 0 : i32
    %c0_i32_0 = arith.constant 0 : i32
    return %arg0, %c0_i32 : i32, i32
  }
  func.func @transform_1(%arg0: i32) -> (i32, i32) {
    %c0_i32 = arith.constant 0 : i32
    %c0_i32_0 = arith.constant 0 : i32
    %c0_i32_1 = arith.constant 0 : i32
    return %c0_i32, %c0_i32_0 : i32, i32
  }
  func.func @transform_2(%arg0: i32) -> (i32, i32) {
    %c0_i32 = arith.constant 0 : i32
    %c0_i32_0 = arith.constant 0 : i32
    %c0_i32_1 = arith.constant 0 : i32
    return %c0_i32, %c0_i32_0 : i32, i32
  }
  func.func @transform_3(%arg0: i32) -> (i32, i32) {
    %c0_i32 = arith.constant 0 : i32
    %c0_i32_0 = arith.constant 0 : i32
    %c0_i32_1 = arith.constant 0 : i32
    return %c0_i32, %c0_i32_0 : i32, i32
  }
  func.func @transform_4(%arg0: i32) -> (i32, i32) {
    %c0_i32 = arith.constant 0 : i32
    %c0_i32_0 = arith.constant 0 : i32
    %c0_i32_1 = arith.constant 0 : i32
    return %c0_i32, %c0_i32_0 : i32, i32
  }
  func.func @transform_5(%arg0: i32) -> (i32, i32) {
    %c0_i32 = arith.constant 0 : i32
    %c0_i32_0 = arith.constant 0 : i32
    return %arg0, %c0_i32 : i32, i32
  }
}

</mosaic_0001>

<llo_original>
// kernel: tpu_custom_call.1
$region0: #{tpu_custom_call.1}
  #allocation0 [shape = 'u32[]', space=smem, size = 0x4, offset = 0x4, fixed_abs, tag = 'smem constant byte address 0x4 - core index']
  #allocation1 [shape = 'u32[72,128]{1,0:T(1,128)}', space=vmem, size = 0x9000, scoped, tag = 'internal scratch']
  %s0 = inlined_call_operand.hbm [shape: f32[8,32], index: 0, kind: input, shape index: {}]
  %s1 = inlined_call_operand.hbm [shape: bf16[32,128], index: 1, kind: input, shape index: {}]
  %s2 = inlined_call_operand.vmem [shape: f32[1,128], index: 2, kind: input, shape index: {}]
  %s3 = inlined_call_operand.hbm [shape: bf16[128,128], index: 3, kind: input, shape index: {}]
  %s4 = inlined_call_operand.vmem [shape: f32[1,128], index: 4, kind: input, shape index: {}]
  %s5 = inlined_call_operand.hbm [shape: f32[8,128], index: 5, kind: output, shape index: {}]
  %s6 = sld [smem:[#allocation0]]
  $region42: #{tpu_custom_call.1} parent=0
    _
  %s8 = ssub.s32 1, %s6
  %s9 = scalar_select 0, %s8, %s6
  $region1: #{tpu_custom_call.1} parent=0
    #allocation2 [shape = 'u8[4096]{0}', space=vmem, size = 0x1000, scoped, tag = 'input window, operand 0, single buffered']
    #allocation3 [shape = 's32[1]{0}', space=sflag, size = 0x4, scoped, tag = 'scoped memory for tpu_custom_call.1']
    #allocation4 [shape = 's32[1]{0}', space=sflag, size = 0x4, scoped, tag = 'scoped memory for tpu_custom_call.1']
    #allocation5 [shape = 'u8[8192]{0}', space=vmem, size = 0x2000, scoped, tag = 'input window, operand 1, single buffered']
    #allocation6 [shape = 's32[1]{0}', space=sflag, size = 0x4, scoped, tag = 'scoped memory for tpu_custom_call.1']
    #allocation7 [shape = 'u8[32768]{0}', space=vmem, size = 0x8000, scoped, tag = 'input window, operand 3, single buffered']
    #allocation8 [shape = 'u8[4096]{0}', space=vmem, size = 0x1000, scoped, tag = 'output window, operand 0, single buffered']
    %10 = vsyncpa [#allocation3], 0
    %11 = vsyncpa [#allocation6], 0
    %12 = vsyncpa [#allocation4], 0
    // Predicated region
    $region2: #{tpu_custom_call.1} parent=1 // pred_check
      _
    $region3: #{tpu_custom_call.1} parent=1 // pred_check_branch
      %14 = sbr.rel (0) target = $region5
    $region4: #{tpu_custom_call.1} parent=1 // pred_region
      %16 = vsyncadd [#allocation3], 0
      %s18 = sshll.u32 %s0, 4
      %s19 = int_to_ptr.hbm [resolvable:$true] %s18
      %s20 = sshll.u32 [#allocation2], 4
      %s21 = int_to_ptr.vmem [resolvable:$true] %s20
      %23 = dma.hbm_to_vmem [thread:$0]  %s19, 128, %s21, [#allocation3]
    $region5: #{tpu_custom_call.1} parent=1 // pred_fallthru
      _
    // Predicated region
    $region6: #{tpu_custom_call.1} parent=1 // pred_check
      _
    $region7: #{tpu_custom_call.1} parent=1 // pred_check_branch
      %25 = sbr.rel (0) target = $region9
    $region8: #{tpu_custom_call.1} parent=1 // pred_region
      %27 = vsyncadd [#allocation6], 0
      %s28 = sshll.u32 %s1, 4
      %s29 = int_to_ptr.hbm [resolvable:$true] %s28
      %s30 = sshll.u32 [#allocation5], 4
      %s31 = int_to_ptr.vmem [resolvable:$true] %s30
      %36 = dma.hbm_to_vmem [thread:$0]  %s29, 256, %s31, [#allocation6], 64, 64, 4
    $region9: #{tpu_custom_call.1} parent=1 // pred_fallthru
      _
    // Predicated region
    $region10: #{tpu_custom_call.1} parent=1 // pred_check
      _
    $region11: #{tpu_custom_call.1} parent=1 // pred_check_branch
      %38 = sbr.rel (0) target = $region13
    $region12: #{tpu_custom_call.1} parent=1 // pred_region
      _
    $region13: #{tpu_custom_call.1} parent=1 // pred_fallthru
      _
    // Predicated region
    $region14: #{tpu_custom_call.1} parent=1 // pred_check
      _
    $region15: #{tpu_custom_call.1} parent=1 // pred_check_branch
      %40 = sbr.rel (0) target = $region17
    $region16: #{tpu_custom_call.1} parent=1 // pred_region
      %42 = vsyncadd [#allocation6], 0
      %s43 = sshll.u32 %s3, 4
      %s44 = int_to_ptr.hbm [resolvable:$true] %s43
      %s45 = sshll.u32 [#allocation7], 4
      %s46 = int_to_ptr.vmem [resolvable:$true] %s45
      %51 = dma.hbm_to_vmem [thread:$0]  %s44, 1024, %s46, [#allocation6], 64, 64, 4
    $region17: #{tpu_custom_call.1} parent=1 // pred_fallthru
      _
    // Predicated region
    $region18: #{tpu_custom_call.1} parent=1 // pred_check
      _
    $region19: #{tpu_custom_call.1} parent=1 // pred_check_branch
      %53 = sbr.rel (0) target = $region21
    $region20: #{tpu_custom_call.1} parent=1 // pred_region
      _
    $region21: #{tpu_custom_call.1} parent=1 // pred_fallthru
      _
    // Predicated region
    $region22: #{tpu_custom_call.1} parent=1 // pred_check
      _
    $region23: #{tpu_custom_call.1} parent=1 // pred_check_branch
      %55 = sbr.rel (0) target = $region25
    $region24: #{tpu_custom_call.1} parent=1 // pred_region
      %57 = dma.done [#allocation3], 128
    $region25: #{tpu_custom_call.1} parent=1 // pred_fallthru
      _
    // Predicated region
    $region26: #{tpu_custom_call.1} parent=1 // pred_check
      _
    $region27: #{tpu_custom_call.1} parent=1 // pred_check_branch
      %59 = sbr.rel (0) target = $region29
    $region28: #{tpu_custom_call.1} parent=1 // pred_region
      %61 = dma.done [#allocation6], 256
    $region29: #{tpu_custom_call.1} parent=1 // pred_fallthru
      _
    // Predicated region
    $region30: #{tpu_custom_call.1} parent=1 // pred_check
      _
    $region31: #{tpu_custom_call.1} parent=1 // pred_check_branch
      %63 = sbr.rel (0) target = $region33
    $region32: #{tpu_custom_call.1} parent=1 // pred_region
      %65 = dma.done [#allocation6], 1024
    $region33: #{tpu_custom_call.1} parent=1 // pred_fallthru
      _
    %v67 = vld [vmem:[#allocation2] sm:$0xff]
    %v68 = vpack.c.bf16 %v67, %v67
    %v69 = vld [vmem:[#allocation5] sm:$0xf]
    %v70 = vld [vmem:[#allocation5 + $0x4] sm:$0xf]
    %v71 = vld [vmem:[#allocation5 + $0x8] sm:$0xf]
    %v72 = vld [vmem:[#allocation5 + $0xc] sm:$0xf]
    %v73 = vld [vmem:[%s2] sm:$0x1]
    %v75 = vperm.slane %v73, 0
    %v81 = vunpack.c.l.b16 %v69
    %v82 = vunpack.c.l.b16 %v70
    %v83 = vunpack.c.l.b16 %v71
    %v84 = vunpack.c.l.b16 %v72
    %v85 = vpack.c.b16 %v82, %v81
    %v86 = vpack.c.b16 %v84, %v83
    %vm89 = vcmask 261120
    %v91 = vsel %vm89, %v68, 0
    %93 = vmatpush.bf16.msra.mxu0 0
    %94 = vmatpush.bf16.msra.mxu0 0
    %95 = vmatpush.bf16.msra.mxu0 0
    %96 = vmatpush.bf16.msra.mxu0 0
    %97 = vmatpush.bf16.msra.mxu0 0
    %98 = vmatpush.bf16.msra.mxu0 0
    %99 = vmatpush.bf16.msra.mxu0 %v86
    %100 = vmatpush.bf16.msra.mxu0 %v85
    %101 = vmatmul.bf16.gmra.mxu0 %v91
    %v102 = vpop.f32.mrf.mxu0
    %v103 = vadd.f32 %v75, %v102
    %v104 = vpop.f32.mrf.mxu0
    %105 = vdwg.mxu0
    %v106 = vmax.f32 %v103, 0.0
    %v107 = vpack.c.bf16 %v106, %v106
    %v108 = vld [vmem:[#allocation7] sm:$0xf]
    %v109 = vld [vmem:[#allocation7 + $0x4] sm:$0xf]
    %v110 = vld [vmem:[#allocation7 + $0x8] sm:$0xf]
    %v111 = vld [vmem:[#allocation7 + $0xc] sm:$0xf]
    %v112 = vld [vmem:[#allocation7 + $0x10] sm:$0xf]
    %v113 = vld [vmem:[#allocation7 + $0x14] sm:$0xf]
    %v114 = vld [vmem:[#allocation7 + $0x18] sm:$0xf]
    %v115 = vld [vmem:[#allocation7 + $0x1c] sm:$0xf]
    %v116 = vld [vmem:[#allocation7 + $0x20] sm:$0xf]
    %v117 = vld [vmem:[#allocation7 + $0x24] sm:$0xf]
    %v118 = vld [vmem:[#allocation7 + $0x28] sm:$0xf]
    %v119 = vld [vmem:[#allocation7 + $0x2c] sm:$0xf]
    %v120 = vld [vmem:[#allocation7 + $0x30] sm:$0xf]
    %v121 = vld [vmem:[#allocation7 + $0x34] sm:$0xf]
    %v122 = vld [vmem:[#allocation7 + $0x38] sm:$0xf]
    %v123 = vld [vmem:[#allocation7 + $0x3c] sm:$0xf]
    %v124 = vld [vmem:[%s4] sm:$0x1]
    %v126 = vperm.slane %v124, 0
    %v144 = vunpack.c.l.b16 %v108
    %v145 = vunpack.c.l.b16 %v109
    %v146 = vunpack.c.l.b16 %v110
    %v147 = vunpack.c.l.b16 %v111
    %v148 = vunpack.c.l.b16 %v112
    %v149 = vunpack.c.l.b16 %v113
    %v150 = vunpack.c.l.b16 %v114
    %v151 = vunpack.c.l.b16 %v115
    %v152 = vunpack.c.l.b16 %v116
    %v153 = vunpack.c.l.b16 %v117
    %v154 = vunpack.c.l.b16 %v118
    %v155 = vunpack.c.l.b16 %v119
    %v156 = vunpack.c.l.b16 %v120
    %v157 = vunpack.c.l.b16 %v121
    %v158 = vunpack.c.l.b16 %v122
    %v159 = vunpack.c.l.b16 %v123
    %v160 = vpack.c.b16 %v145, %v144
    %v161 = vpack.c.b16 %v147, %v146
    %v162 = vpack.c.b16 %v149, %v148
    %v163 = vpack.c.b16 %v151, %v150
    %v164 = vpack.c.b16 %v153, %v152
    %v165 = vpack.c.b16 %v155, %v154
    %v166 = vpack.c.b16 %v157, %v156
    %v167 = vpack.c.b16 %v159, %v158
    %176 = vmatpush.bf16.msra.mxu0 %v167
    %177 = vmatpush.bf16.msra.mxu0 %v166
    %178 = vmatpush.bf16.msra.mxu0 %v165
    %179 = vmatpush.bf16.msra.mxu0 %v164
    %180 = vmatpush.bf16.msra.mxu0 %v163
    %181 = vmatpush.bf16.msra.mxu0 %v162
    %182 = vmatpush.bf16.msra.mxu0 %v161
    %183 = vmatpush.bf16.msra.mxu0 %v160
    %184 = vmatmul.bf16.gmra.mxu0 %v107
    %v185 = vpop.f32.mrf.mxu0
    %v186 = vadd.f32 %v126, %v185
    %v187 = vpop.f32.mrf.mxu0
    %188 = vdwg.mxu0
    %189 = vst [vmem:[#allocation8] sm:$0xff] %v186
    // Predicated region
    $region34: #{tpu_custom_call.1} parent=1 // pred_check
      _
    $region35: #{tpu_custom_call.1} parent=1 // pred_check_branch
      %191 = sbr.rel (0) target = $region37
    $region36: #{tpu_custom_call.1} parent=1 // pred_region
      %193 = vsyncadd [#allocation4], 0
      %s195 = sshll.u32 [#allocation8], 4
      %s196 = int_to_ptr.vmem [resolvable:$true] %s195
      %s197 = sshll.u32 %s5, 4
      %s198 = int_to_ptr.hbm [resolvable:$true] %s197
      %200 = dma.vmem_to_hbm [thread:$0]  %s196, 128, %s198, [#allocation4]
    $region37: #{tpu_custom_call.1} parent=1 // pred_fallthru
      _
    // Predicated region
    $region38: #{tpu_custom_call.1} parent=1 // pred_check
      _
    $region39: #{tpu_custom_call.1} parent=1 // pred_check_branch
      %202 = sbr.rel (0) target = $region41
    $region40: #{tpu_custom_call.1} parent=1 // pred_region
      %204 = dma.done [#allocation4], 128
    $region41: #{tpu_custom_call.1} parent=1 // pred_fallthru
      _
    %205 = vsyncpa [#allocation3], 1
    %206 = vsyncpa [#allocation6], 1
    %207 = vsyncpa [#allocation4], 1

</llo_original>
